<compile_context>
chip_gen: v5e
topology: v5e:2x2
jax: 0.10.0
libtpu: 0.0.40
codegen_flags: <defaults>
</compile_context>

<pallas_src>
import jax
import jax.numpy as jnp
from jax.experimental import pallas as pl
from jax.experimental.pallas import tpu as pltpu

BINS = (1, 2, 3, 4, 8, 16, 32, 64)
NUM_BINS = len(BINS)          # 8
VOCAB = NUM_BINS + 1          # 9 embedding rows
DIST_DIM = 20                 # distance_dim default


def _round_up(x, m):
    return ((x + m - 1) // m) * m


def _distance_kernel(lengths_ref, embed_t_ref, out_ref):
    # lengths_ref: (1, TN) int32 ; embed_t_ref: (D, V) f32 ; out_ref: (D, TN) f32
    lengths = lengths_ref[...]                        # (1, TN)
    tn = lengths.shape[1]

    # stoi: count how many bins the length is >= to  -> bin index in [0, 8]
    idx = jnp.zeros_like(lengths)
    for b in BINS:                                    # static unrolled (8 compares, VPU)
        idx = idx + (lengths >= b).astype(jnp.int32)

    # Transposed one-hot (V, TN): sublane-iota compare against idx (sublane broadcast).
    vocab_ids = jax.lax.broadcasted_iota(jnp.int32, (VOCAB, tn), dimension=0)
    onehot_t = (idx == vocab_ids).astype(jnp.float32)  # (V, TN)

    # Gather as (D, V) x (V, TN) matmul -> (D, TN); lane dim of the store is TN
    # (multiple of 128) so the write-back is unmasked / lane-dense.
    out_ref[...] = jnp.dot(embed_t_ref[...], onehot_t,
                           preferred_element_type=jnp.float32)


def distance_forward(lengths, embed_table, *, tn=1024):
    """lengths: (N,) int, embed_table: (VOCAB, D) f32 -> (N, D) f32 (eval forward)."""
    n = int(lengths.shape[0])
    d = int(embed_table.shape[1])

    # Row-tile: multiple of 128 (lane-dense blocks), clamped so tiny inputs use one tile.
    tn = max(128, _round_up(int(tn), 128))
    tn = min(tn, _round_up(n, 128))
    n_pad = _round_up(n, tn)
    grid = (n_pad // tn,)

    lengths_1d = lengths.astype(jnp.int32).reshape(n)
    if n_pad != n:
        # Padded entries map to bin 0 and are sliced away afterwards.
        lengths_1d = jnp.pad(lengths_1d, (0, n_pad - n))
    lengths_2d = lengths_1d.reshape(1, n_pad)

    embed_t = embed_table.astype(jnp.float32).T       # (D, VOCAB), 720 B, VMEM-resident

    out_t = pl.pallas_call(
        _distance_kernel,
        out_shape=jax.ShapeDtypeStruct((d, n_pad), jnp.float32),
        grid=grid,
        in_specs=[
            pl.BlockSpec((1, tn), lambda i: (0, i)),          # streamed lengths tile
            pl.BlockSpec((d, VOCAB), lambda i: (0, 0)),       # constant block -> resident table
        ],
        out_specs=pl.BlockSpec((d, tn), lambda i: (0, i)),    # lane-dense (D, TN) tile
        compiler_params=pltpu.CompilerParams(
            dimension_semantics=("parallel",)),               # shard grid across TCs (v7x)
        cost_estimate=pl.CostEstimate(
            flops=2 * n_pad * VOCAB * d,
            transcendentals=0,
            bytes_accessed=4 * n_pad + 4 * n_pad * d + 4 * VOCAB * d,
        ),
    )(lengths_2d, embed_t)

    # Layout plumbing back to the module's (N, D) output.
    return out_t[:, :n].T


def _reference(lengths, embed_table):
    # plain-JAX reference of stoi + embedding lookup (eval mode)
    bins = jnp.array(BINS, dtype=jnp.int32)
    idx = jnp.sum(lengths[:, None].astype(jnp.int32) >= bins[None, :], axis=1)
    return embed_table[idx]


if __name__ == "__main__":
    key = jax.random.PRNGKey(0)
    k_emb, k_len1, k_len2 = jax.random.split(key, 3)

    # Deterministic parameter init: nn.Embedding default N(0, 1), shape (9, 20)
    embed_table = jax.random.normal(k_emb, (VOCAB, DIST_DIM), dtype=jnp.float32)

    # Small example input: 8 span-distance lengths in [0, 100) -> single tile
    lengths_small = jax.random.randint(k_len1, (8,), 0, 100, dtype=jnp.int32)
    out_small = jax.block_until_ready(distance_forward(lengths_small, embed_table))
    ref_small = _reference(lengths_small, embed_table)
    assert out_small.shape == (8, DIST_DIM)
    assert jnp.allclose(out_small, ref_small, atol=1e-6), "mismatch vs reference (small)"

    # Multi-tile path: 300 lengths with TN=128 -> 3 grid steps + tail padding
    lengths_multi = jax.random.randint(k_len2, (300,), 0, 200, dtype=jnp.int32)
    out_multi = jax.block_until_ready(
        distance_forward(lengths_multi, embed_table, tn=128))
    ref_multi = _reference(lengths_multi, embed_table)
    assert out_multi.shape == (300, DIST_DIM)
    assert jnp.allclose(out_multi, ref_multi, atol=1e-6), "mismatch vs reference (multi)"

    print("KERNEL_OK")
</pallas_src>

<mosaic_0001>
module attributes {stable_mosaic.version = 11 : i64} {
  func.func @_distance_kernel(%arg0: i32, %arg1: memref<1x128xi32, #tpu.memory_space<vmem>>, %arg2: memref<20x9xf32, #tpu.memory_space<vmem>>, %arg3: memref<20x128xf32, #tpu.memory_space<vmem>>) attributes {dimension_semantics = [#tpu.dimension_semantics<parallel>], iteration_bounds = array<i64: 1>, scalar_prefetch = 0 : i64, scratch_operands = 0 : i64, tpu.core_type = #tpu.core_type<tc>, window_params = [{transform_indices = @transform_0, window_bounds = array<i64: 1, 128>}, {pipeline_mode = #tpu.pipeline_mode<synchronous>, transform_indices = @transform_1, window_bounds = array<i64: 20, 9>}, {transform_indices = @transform_2, window_bounds = array<i64: 20, 128>}]} {
    %c0 = arith.constant 0 : index
    %c0_0 = arith.constant 0 : index
    %0 = vector.load %arg1[%c0, %c0_0] : memref<1x128xi32, #tpu.memory_space<vmem>>, vector<1x128xi32>
    %c0_i32 = arith.constant 0 : i32
    %1 = vector.broadcast %c0_i32 : i32 to vector<1x128xi32>
    %c1_i32 = arith.constant 1 : i32
    %2 = vector.broadcast %c1_i32 : i32 to vector<1x128xi32>
    %3 = arith.cmpi sge, %0, %2 : vector<1x128xi32>
    %4 = arith.extui %3 : vector<1x128xi1> to vector<1x128xi32>
    %5 = arith.addi %1, %4 : vector<1x128xi32>
    %c2_i32 = arith.constant 2 : i32
    %6 = vector.broadcast %c2_i32 : i32 to vector<1x128xi32>
    %7 = arith.cmpi sge, %0, %6 : vector<1x128xi32>
    %8 = arith.extui %7 : vector<1x128xi1> to vector<1x128xi32>
    %9 = arith.addi %5, %8 : vector<1x128xi32>
    %c3_i32 = arith.constant 3 : i32
    %10 = vector.broadcast %c3_i32 : i32 to vector<1x128xi32>
    %11 = arith.cmpi sge, %0, %10 : vector<1x128xi32>
    %12 = arith.extui %11 : vector<1x128xi1> to vector<1x128xi32>
    %13 = arith.addi %9, %12 : vector<1x128xi32>
    %c4_i32 = arith.constant 4 : i32
    %14 = vector.broadcast %c4_i32 : i32 to vector<1x128xi32>
    %15 = arith.cmpi sge, %0, %14 : vector<1x128xi32>
    %16 = arith.extui %15 : vector<1x128xi1> to vector<1x128xi32>
    %17 = arith.addi %13, %16 : vector<1x128xi32>
    %c8_i32 = arith.constant 8 : i32
    %18 = vector.broadcast %c8_i32 : i32 to vector<1x128xi32>
    %19 = arith.cmpi sge, %0, %18 : vector<1x128xi32>
    %20 = arith.extui %19 : vector<1x128xi1> to vector<1x128xi32>
    %21 = arith.addi %17, %20 : vector<1x128xi32>
    %c16_i32 = arith.constant 16 : i32
    %22 = vector.broadcast %c16_i32 : i32 to vector<1x128xi32>
    %23 = arith.cmpi sge, %0, %22 : vector<1x128xi32>
    %24 = arith.extui %23 : vector<1x128xi1> to vector<1x128xi32>
    %25 = arith.addi %21, %24 : vector<1x128xi32>
    %c32_i32 = arith.constant 32 : i32
    %26 = vector.broadcast %c32_i32 : i32 to vector<1x128xi32>
    %27 = arith.cmpi sge, %0, %26 : vector<1x128xi32>
    %28 = arith.extui %27 : vector<1x128xi1> to vector<1x128xi32>
    %29 = arith.addi %25, %28 : vector<1x128xi32>
    %c64_i32 = arith.constant 64 : i32
    %30 = vector.broadcast %c64_i32 : i32 to vector<1x128xi32>
    %31 = arith.cmpi sge, %0, %30 : vector<1x128xi32>
    %32 = arith.extui %31 : vector<1x128xi1> to vector<1x128xi32>
    %33 = arith.addi %29, %32 : vector<1x128xi32>
    %34 = tpu.iota {dimensions = array<i32: 0>} : vector<9x128xi32>
    %35 = vector.broadcast %33 : vector<1x128xi32> to vector<9x128xi32>
    %36 = arith.cmpi eq, %35, %34 : vector<9x128xi32>
    %37 = arith.extui %36 : vector<9x128xi1> to vector<9x128xi32>
    %38 = arith.sitofp %37 : vector<9x128xi32> to vector<9x128xf32>
    %c0_1 = arith.constant 0 : index
    %c0_2 = arith.constant 0 : index
    %39 = vector.load %arg2[%c0_1, %c0_2] : memref<20x9xf32, #tpu.memory_space<vmem>>, vector<20x9xf32>
    %cst = arith.constant dense<0.000000e+00> : vector<20x128xf32>
    %40 = tpu.matmul %39, %38, %cst {dimension_numbers = #tpu.dot_dimension_numbers<[1], [0], [0], [1], [0, 0, 1, 1], [], []>} : vector<20x9xf32>, vector<9x128xf32>, vector<20x128xf32> -> vector<20x128xf32>
    %c0_3 = arith.constant 0 : index
    %c0_4 = arith.constant 0 : index
    %41 = vector.load %arg3[%c0_3, %c0_4] : memref<20x128xf32, #tpu.memory_space<vmem>>, vector<20x128xf32>
    tpu.vector_store %arg3[%c0_3, %c0_4], %40 {strides = array<i32>} : memref<20x128xf32, #tpu.memory_space<vmem>>, vector<20x128xf32>,
    return
  }
  func.func @transform_0(%arg0: i32) -> (i32, i32) {
    %c0_i32 = arith.constant 0 : i32
    %c0_i32_0 = arith.constant 0 : i32
    return %c0_i32, %arg0 : i32, i32
  }
  func.func @transform_1(%arg0: i32) -> (i32, i32) {
    %c0_i32 = arith.constant 0 : i32
    %c0_i32_0 = arith.constant 0 : i32
    %c0_i32_1 = arith.constant 0 : i32
    return %c0_i32, %c0_i32_0 : i32, i32
  }
  func.func @transform_2(%arg0: i32) -> (i32, i32) {
    %c0_i32 = arith.constant 0 : i32
    %c0_i32_0 = arith.constant 0 : i32
    return %c0_i32, %arg0 : i32, i32
  }
}

</mosaic_0001>

<llo_original>
// kernel: tpu_custom_call.1
$region0: #{tpu_custom_call.1}
  #allocation0 [shape = 'u32[]', space=smem, size = 0x4, offset = 0x4, fixed_abs, tag = 'smem constant byte address 0x4 - core index']
  #allocation1 [shape = 'u32[72,128]{1,0:T(1,128)}', space=vmem, size = 0x9000, scoped, tag = 'internal scratch']
  %s0 = inlined_call_operand.vmem [shape: s32[1,128], index: 0, kind: input, shape index: {}]
  %s1 = inlined_call_operand.vmem [shape: f32[20,9], index: 1, kind: input, shape index: {}]
  %s2 = inlined_call_operand.hbm [shape: f32[20,128], index: 2, kind: output, shape index: {}]
  %s3 = sld [smem:[#allocation0]]
  $region18: #{tpu_custom_call.1} parent=0
    _
  %s5 = ssub.s32 1, %s3
  %s6 = scalar_select 0, %s5, %s3
  $region1: #{tpu_custom_call.1} parent=0
    #allocation2 [shape = 'u8[12288]{0}', space=vmem, size = 0x3000, scoped, tag = 'output window, operand 0, single buffered']
    #allocation3 [shape = 's32[1]{0}', space=sflag, size = 0x4, scoped, tag = 'scoped memory for tpu_custom_call.1']
    %7 = vsyncpa [#allocation3], 0
    // Predicated region
    $region2: #{tpu_custom_call.1} parent=1 // pred_check
      _
    $region3: #{tpu_custom_call.1} parent=1 // pred_check_branch
      %9 = sbr.rel (0) target = $region5
    $region4: #{tpu_custom_call.1} parent=1 // pred_region
      _
    $region5: #{tpu_custom_call.1} parent=1 // pred_fallthru
      _
    // Predicated region
    $region6: #{tpu_custom_call.1} parent=1 // pred_check
      _
    $region7: #{tpu_custom_call.1} parent=1 // pred_check_branch
      %11 = sbr.rel (0) target = $region9
    $region8: #{tpu_custom_call.1} parent=1 // pred_region
      _
    $region9: #{tpu_custom_call.1} parent=1 // pred_fallthru
      _
    %v12 = vld [vmem:[%s0] sm:$0x1]
    %vm13 = vcmp.ge.s32.totalorder %v12, 1
    %v14 = vsel %vm13, 1, 0
    %vm15 = vcmp.ge.s32.totalorder %v12, 2
    %v16 = vsel %vm15, 1, 0
    %v17 = vadd.s32 %v14, %v16
    %vm18 = vcmp.ge.s32.totalorder %v12, 3
    %v19 = vsel %vm18, 1, 0
    %v20 = vadd.s32 %v17, %v19
    %vm21 = vcmp.ge.s32.totalorder %v12, 4
    %v22 = vsel %vm21, 1, 0
    %v23 = vadd.s32 %v20, %v22
    %vm24 = vcmp.ge.s32.totalorder %v12, 8
    %v25 = vsel %vm24, 1, 0
    %v26 = vadd.s32 %v23, %v25
    %vm27 = vcmp.ge.s32.totalorder %v12, 16
    %v28 = vsel %vm27, 1, 0
    %v29 = vadd.s32 %v26, %v28
    %vm30 = vcmp.ge.s32.totalorder %v12, 32
    %v31 = vsel %vm30, 1, 0
    %v32 = vadd.s32 %v29, %v31
    %vm33 = vcmp.ge.s32.totalorder %v12, 64
    %v34 = vsel %vm33, 1, 0
    %v35 = vadd.s32 %v32, %v34
    %v36 = vlaneseq
    %v37 = vshrl.u32 %v36, 7
    %v38 = vadd.s32 %v37, 8
    %v39 = vperm.slane %v35, 0
    %vm40 = vcmp.eq.s32.totalorder %v39, %v37
    %vm41 = vcmp.eq.s32.totalorder %v39, %v38
    %v42 = vsel %vm40, 1, 0
    %v43 = vsel %vm41, 1, 0
    %v44 = vcvt.s32.f32 %v42
    %v45 = vcvt.s32.f32 %v43
    %v46 = vld [vmem:[%s1] sm:$0xff]
    %v47 = vld [vmem:[%s1 + $0x8] sm:$0xff]
    %v48 = vld [vmem:[%s1 + $0x10] sm:$0xf]
    %vm49 = vcmask 72704
    %v51 = vsel %vm49, %v46, 0
    %v54 = vsel %vm49, %v47, 0
    %v57 = vsel %vm49, %v48, 0
    %vm59 = vcmask 1040384
    %v61 = vsel %vm59, %v45, 0
    %63 = vmatpush.msra.mxu0 0.0
    %64 = vmatpush.msra.mxu0 0.0
    %65 = vmatpush.msra.mxu0 0.0
    %66 = vmatpush.msra.mxu0 0.0
    %67 = vmatpush.msra.mxu0 0.0
    %68 = vmatpush.msra.mxu0 0.0
    %69 = vmatpush.msra.mxu0 0.0
    %70 = vmatpush.msra.mxu0 0.0
    %71 = vmatpush.msra.mxu0 0.0
    %72 = vmatpush.msra.mxu0 0.0
    %73 = vmatpush.msra.mxu0 0.0
    %74 = vmatpush.msra.mxu0 0.0
    %75 = vmatpush.msra.mxu0 0.0
    %76 = vmatpush.msra.mxu0 0.0
    %77 = vmatpush.msra.mxu0 %v61
    %78 = vmatpush.msra.mxu0 %v44
    %79 = vmatmul.f32.gmra.mxu0 %v51
    %v80 = vpop.f32.mrf.mxu0
    %v81 = vadd.f32 0.0, %v80
    %82 = vmatmul.f32.gmra.mxu0 %v54
    %v83 = vpop.f32.mrf.mxu0
    %v84 = vadd.f32 0.0, %v83
    %85 = vmatmul.f32.gmra.mxu0 %v57
    %v86 = vpop.f32.mrf.mxu0
    %v87 = vadd.f32 0.0, %v86
    %88 = vdwg.mxu0
    %89 = vst [vmem:[#allocation2] sm:$0xff] %v81
    %90 = vst [vmem:[#allocation2 + $0x8] sm:$0xff] %v84
    %91 = vst [vmem:[#allocation2 + $0x10] sm:$0xf] %v87
    // Predicated region
    $region10: #{tpu_custom_call.1} parent=1 // pred_check
      _
    $region11: #{tpu_custom_call.1} parent=1 // pred_check_branch
      %93 = sbr.rel (0) target = $region13
    $region12: #{tpu_custom_call.1} parent=1 // pred_region
      %95 = vsyncadd [#allocation3], 0
      %s96 = sshll.u32 [#allocation2], 4
      %s97 = int_to_ptr.vmem [resolvable:$true] %s96
      %s98 = sshll.u32 %s2, 4
      %s99 = int_to_ptr.hbm [resolvable:$true] %s98
      %104 = dma.vmem_to_hbm [thread:$0]  %s97, 384, %s99, [#allocation3], 128, 128, 8
    $region13: #{tpu_custom_call.1} parent=1 // pred_fallthru
      _
    // Predicated region
    $region14: #{tpu_custom_call.1} parent=1 // pred_check
      _
    $region15: #{tpu_custom_call.1} parent=1 // pred_check_branch
      %106 = sbr.rel (0) target = $region17
    $region16: #{tpu_custom_call.1} parent=1 // pred_region
      %108 = dma.done [#allocation3], 384
    $region17: #{tpu_custom_call.1} parent=1 // pred_fallthru
      _
    %109 = vsyncpa [#allocation3], 1

</llo_original>
